<compile_context>
chip_gen: v6e
topology: v6e:2x2x1
jax: 0.10.0
libtpu: 0.0.40
codegen_flags: <defaults>
</compile_context>

<pallas_src>
import jax
import jax.numpy as jnp
from jax.experimental import pallas as pl
from jax.experimental.pallas import tpu as pltpu


def mlp_kernel(xT_ref, w1T_ref, b1_ref, w2T_ref, b2_ref, oT_ref):
    # xT:  (in_dim, TB)   -- batch on the lane axis (lane-dense)
    # w1T: (hid, in_dim), b1: (hid, 1)
    # w2T: (out_dim, hid), b2: (out_dim, 1)
    h = jnp.dot(w1T_ref[...], xT_ref[...], preferred_element_type=jnp.float32)
    h = jnp.maximum(h + b1_ref[...], 0.0)                      # (hid, TB)
    y = jnp.dot(w2T_ref[...], h, preferred_element_type=jnp.float32)
    oT_ref[...] = (y + b2_ref[...]).astype(oT_ref.dtype)       # (out_dim, TB)


def mlp_forward(x, w1, b1, w2, b2, *, block_b=4096):
    """x: (B, 4), w1: (4, 10), b1: (10,), w2: (10, 3), b2: (3,) -> (B, 3)."""
    B = x.shape[0]
    in_dim, hid = w1.shape
    out_dim = w2.shape[1]

    # Feature-major / batch-in-lanes layout.
    xT = x.T                           # (in_dim, B)
    w1T = w1.T                         # (hid, in_dim)
    w2T = w2.T                         # (out_dim, hid)
    b1c = b1.reshape(hid, 1)
    b2c = b2.reshape(out_dim, 1)

    # Batch tile: 128-lane aligned, capped at block_b; pad B up to a multiple.
    b_aligned = ((B + 127) // 128) * 128
    tb = min(block_b, b_aligned)
    Bp = ((B + tb - 1) // tb) * tb
    if Bp != B:
        xT = jnp.pad(xT, ((0, 0), (0, Bp - B)))

    grid = (Bp // tb,)

    outT = pl.pallas_call(
        mlp_kernel,
        out_shape=jax.ShapeDtypeStruct((out_dim, Bp), x.dtype),
        grid_spec=pltpu.PrefetchScalarGridSpec(
            num_scalar_prefetch=0,
            grid=grid,
            in_specs=[
                # Batch-tiled input (lane-dense).
                pl.BlockSpec((in_dim, tb), lambda i: (0, i)),
                # Weights / biases: full-array blocks, constant index maps
                # (resident in VMEM across all grid steps).
                pl.BlockSpec((hid, in_dim), lambda i: (0, 0)),
                pl.BlockSpec((hid, 1), lambda i: (0, 0)),
                pl.BlockSpec((out_dim, hid), lambda i: (0, 0)),
                pl.BlockSpec((out_dim, 1), lambda i: (0, 0)),
            ],
            out_specs=pl.BlockSpec((out_dim, tb), lambda i: (0, i)),
        ),
        compiler_params=pltpu.CompilerParams(
            dimension_semantics=("parallel",),
            vmem_limit_bytes=64 * 1024 * 1024,
        ),
    )(xT, w1T, b1c, w2T, b2c)

    # Drop batch padding, return PyTorch-layout (B, out_dim).
    return outT[:, :B].T


def init_params(key):
    """Deterministic init mimicking torch.nn.Linear default (uniform +-1/sqrt(fan_in))."""
    k1, k2, k3, k4 = jax.random.split(key, 4)
    in1, hid, out = 4, 10, 3
    bound1 = 1.0 / jnp.sqrt(in1)
    bound2 = 1.0 / jnp.sqrt(hid)
    w1 = jax.random.uniform(k1, (in1, hid), jnp.float32, -bound1, bound1)
    b1 = jax.random.uniform(k2, (hid,), jnp.float32, -bound1, bound1)
    w2 = jax.random.uniform(k3, (hid, out), jnp.float32, -bound2, bound2)
    b2 = jax.random.uniform(k4, (out,), jnp.float32, -bound2, bound2)
    return w1, b1, w2, b2


if __name__ == "__main__":
    key = jax.random.PRNGKey(0)
    kx, kp = jax.random.split(key)

    # Small, non-multiple-of-128 batch to exercise padding + a 2-step grid.
    B = 300
    x = jax.random.normal(kx, (B, 4), dtype=jnp.float32)
    w1, b1, w2, b2 = init_params(kp)

    out = mlp_forward(x, w1, b1, w2, b2, block_b=256)
    jax.block_until_ready(out)

    # Reference check in plain JAX.
    ref = jnp.maximum(x @ w1 + b1, 0.0) @ w2 + b2
    assert out.shape == (B, 3)
    assert jnp.allclose(out, ref, atol=1e-5, rtol=1e-5)

    print("KERNEL_OK")
</pallas_src>

<mosaic_0001>
module attributes {stable_mosaic.version = 11 : i64} {
  func.func @mlp_kernel(%arg0: i32, %arg1: memref<4x256xf32, #tpu.memory_space<vmem>>, %arg2: memref<10x4xf32, #tpu.memory_space<vmem>>, %arg3: memref<10x1xf32, #tpu.memory_space<vmem>>, %arg4: memref<3x10xf32, #tpu.memory_space<vmem>>, %arg5: memref<3x1xf32, #tpu.memory_space<vmem>>, %arg6: memref<3x256xf32, #tpu.memory_space<vmem>>) attributes {dimension_semantics = [#tpu.dimension_semantics<parallel>], iteration_bounds = array<i64: 2>, scalar_prefetch = 0 : i64, scratch_operands = 0 : i64, tpu.core_type = #tpu.core_type<tc>, window_params = [{transform_indices = @transform_0, window_bounds = array<i64: 4, 256>}, {pipeline_mode = #tpu.pipeline_mode<synchronous>, transform_indices = @transform_1, window_bounds = array<i64: 10, 4>}, {pipeline_mode = #tpu.pipeline_mode<synchronous>, transform_indices = @transform_2, window_bounds = array<i64: 10, 1>}, {pipeline_mode = #tpu.pipeline_mode<synchronous>, transform_indices = @transform_3, window_bounds = array<i64: 3, 10>}, {pipeline_mode = #tpu.pipeline_mode<synchronous>, transform_indices = @transform_4, window_bounds = array<i64: 3, 1>}, {transform_indices = @transform_5, window_bounds = array<i64: 3, 256>}]} {
    %c0 = arith.constant 0 : index
    %c0_0 = arith.constant 0 : index
    %0 = vector.load %arg2[%c0, %c0_0] : memref<10x4xf32, #tpu.memory_space<vmem>>, vector<10x4xf32>
    %c0_1 = arith.constant 0 : index
    %c0_2 = arith.constant 0 : index
    %1 = vector.load %arg1[%c0_1, %c0_2] : memref<4x256xf32, #tpu.memory_space<vmem>>, vector<4x256xf32>
    %cst = arith.constant dense<0.000000e+00> : vector<10x256xf32>
    %2 = tpu.matmul %0, %1, %cst {dimension_numbers = #tpu.dot_dimension_numbers<[1], [0], [0], [1], [0, 0, 1, 1], [], []>} : vector<10x4xf32>, vector<4x256xf32>, vector<10x256xf32> -> vector<10x256xf32>
    %c0_3 = arith.constant 0 : index
    %c0_4 = arith.constant 0 : index
    %3 = vector.load %arg3[%c0_3, %c0_4] : memref<10x1xf32, #tpu.memory_space<vmem>>, vector<10x1xf32>
    %4 = vector.broadcast %3 : vector<10x1xf32> to vector<10x256xf32>
    %5 = arith.addf %2, %4 : vector<10x256xf32>
    %cst_5 = arith.constant 0.000000e+00 : f32
    %6 = vector.broadcast %cst_5 : f32 to vector<10x256xf32>
    %7 = arith.maximumf %5, %6 : vector<10x256xf32>
    %c0_6 = arith.constant 0 : index
    %c0_7 = arith.constant 0 : index
    %8 = vector.load %arg4[%c0_6, %c0_7] : memref<3x10xf32, #tpu.memory_space<vmem>>, vector<3x10xf32>
    %cst_8 = arith.constant dense<0.000000e+00> : vector<3x256xf32>
    %9 = tpu.matmul %8, %7, %cst_8 {dimension_numbers = #tpu.dot_dimension_numbers<[1], [0], [0], [1], [0, 0, 1, 1], [], []>} : vector<3x10xf32>, vector<10x256xf32>, vector<3x256xf32> -> vector<3x256xf32>
    %c0_9 = arith.constant 0 : index
    %c0_10 = arith.constant 0 : index
    %10 = vector.load %arg5[%c0_9, %c0_10] : memref<3x1xf32, #tpu.memory_space<vmem>>, vector<3x1xf32>
    %11 = vector.broadcast %10 : vector<3x1xf32> to vector<3x256xf32>
    %12 = arith.addf %9, %11 : vector<3x256xf32>
    %c0_11 = arith.constant 0 : index
    %c0_12 = arith.constant 0 : index
    %13 = vector.load %arg6[%c0_11, %c0_12] : memref<3x256xf32, #tpu.memory_space<vmem>>, vector<3x256xf32>
    tpu.vector_store %arg6[%c0_11, %c0_12], %12 {strides = array<i32>} : memref<3x256xf32, #tpu.memory_space<vmem>>, vector<3x256xf32>,
    return
  }
  func.func @transform_0(%arg0: i32) -> (i32, i32) {
    %c0_i32 = arith.constant 0 : i32
    %c0_i32_0 = arith.constant 0 : i32
    return %c0_i32, %arg0 : i32, i32
  }
  func.func @transform_1(%arg0: i32) -> (i32, i32) {
    %c0_i32 = arith.constant 0 : i32
    %c0_i32_0 = arith.constant 0 : i32
    %c0_i32_1 = arith.constant 0 : i32
    return %c0_i32, %c0_i32_0 : i32, i32
  }
  func.func @transform_2(%arg0: i32) -> (i32, i32) {
    %c0_i32 = arith.constant 0 : i32
    %c0_i32_0 = arith.constant 0 : i32
    %c0_i32_1 = arith.constant 0 : i32
    return %c0_i32, %c0_i32_0 : i32, i32
  }
  func.func @transform_3(%arg0: i32) -> (i32, i32) {
    %c0_i32 = arith.constant 0 : i32
    %c0_i32_0 = arith.constant 0 : i32
    %c0_i32_1 = arith.constant 0 : i32
    return %c0_i32, %c0_i32_0 : i32, i32
  }
  func.func @transform_4(%arg0: i32) -> (i32, i32) {
    %c0_i32 = arith.constant 0 : i32
    %c0_i32_0 = arith.constant 0 : i32
    %c0_i32_1 = arith.constant 0 : i32
    return %c0_i32, %c0_i32_0 : i32, i32
  }
  func.func @transform_5(%arg0: i32) -> (i32, i32) {
    %c0_i32 = arith.constant 0 : i32
    %c0_i32_0 = arith.constant 0 : i32
    return %c0_i32, %arg0 : i32, i32
  }
}

</mosaic_0001>

<llo_original>
// kernel: tpu_custom_call.1
$region0: #{tpu_custom_call.1}
  #allocation0 [shape = 'u32[]', space=smem, size = 0x4, offset = 0x4, fixed_abs, tag = 'smem constant byte address 0x4 - core index']
  #allocation1 [shape = 'u32[144,128]{1,0:T(1,128)}', space=vmem, size = 0x12000, scoped, tag = 'internal scratch']
  %s0 = inlined_call_operand.vmem [shape: f32[4,512], index: 0, kind: input, shape index: {}]
  %s1 = inlined_call_operand.vmem [shape: f32[10,4], index: 1, kind: input, shape index: {}]
  %s2 = inlined_call_operand.vmem [shape: f32[10,1], index: 2, kind: input, shape index: {}]
  %s3 = inlined_call_operand.vmem [shape: f32[3,10], index: 3, kind: input, shape index: {}]
  %s4 = inlined_call_operand.vmem [shape: f32[3,1], index: 4, kind: input, shape index: {}]
  %s5 = inlined_call_operand.hbm [shape: f32[3,512], index: 5, kind: output, shape index: {}]
  %s6 = sld [smem:[#allocation0]]
  $region53: #{tpu_custom_call.1} parent=0
    _
  %s8 = ssub.s32 1, %s6
  %s9 = scalar_select 0, %s8, %s6
  $region1: #{tpu_custom_call.1} parent=0
    #allocation2 [shape = 'u8[8192]{0}', space=vmem, size = 0x2000, scoped, tag = 'output window, operand 0']
    #allocation3 [shape = 's32[2]{0}', space=sflag, size = 0x8, scoped, tag = 'scoped memory for tpu_custom_call.1']
    %10 = vsyncpa [#allocation3], 0
    %s11 = scalar_lea.sflag [#allocation3], 1
    %12 = vsyncpa %s11, 0
    loop: start=0, step=1, limit=4
    $region2: #{tpu_custom_call.1} parent=1 // loop_pre_header
      _
    $region3: #{tpu_custom_call.1} parent=1 // loop_header
      %s14 = sphi 0, %s18
      %p15 = scmp.ge.s32.totalorder %s14, 4
      %s24 = sphi 0, %s26
      %s27 = sphi 0, %s24
      %s28 = sphi 0, %s27
      %s44 = sphi 0, %s28
      %s48 = sphi 0, %s48
      %s50 = sphi 0, %s48
      %s51 = sphi 0, %s50
      %s65 = sphi 0, %s51
      %s69 = sphi 0, %s69
      %s71 = sphi 0, %s69
      %s72 = sphi 0, %s71
      %s86 = sphi 0, %s72
      %s90 = sphi 0, %s90
      %s92 = sphi 0, %s90
      %s93 = sphi 0, %s92
      %s107 = sphi 0, %s93
      %s111 = sphi 0, %s111
      %s113 = sphi 0, %s111
      %s114 = sphi 0, %s113
      %s128 = sphi 0, %s114
      %s134 = sphi 0, %s136
      %s137 = sphi 0, %s134
      %s138 = sphi 0, %s137
      %s154 = sphi 0, %s138
    $region4: #{tpu_custom_call.1} parent=1 // loop_header_branch
      %17 = sbr.rel (%p15) target = $region8
    $region5: #{tpu_custom_call.1} parent=1 // loop_body
      %s19 = ssub.s32 %s14, 1
      %s20 = ssub.s32 %s14, 2
      %s21 = sadd.s32 %s14, 1
      %s22 = ssub.s32 %s14, %s21
      %p23 = scmp.eq.s32.totalorder %s22, 0
      %s25 = sadd.s32 %s24, 1
      %s26 = scalar_select %p23, %s24, %s25
      %p29 = pneg %p23
      %p30 = scmp.eq.s32.totalorder %s14, 1
      %p31 = por %p29, %p30
      %p32 = scmp.ne.s32.totalorder %s24, %s27
      %p33 = scmp.eq.s32.totalorder %s14, 0
      %p34 = por %p32, %p33
      %p35 = scmp.ne.s32.totalorder %s24, %s27
      %p36 = scmp.eq.s32.totalorder %s19, 1
      %p37 = por %p35, %p36
      %p38 = scmp.ne.s32.totalorder %s27, %s28
      %p39 = scmp.eq.s32.totalorder %s19, 0
      %p40 = por %p38, %p39
      %p41 = scmp.ne.s32.totalorder %s27, %s28
      %p42 = scmp.eq.s32.totalorder %s20, 1
      %p43 = por %p41, %p42
      %p45 = scmp.ne.s32.totalorder %s28, %s44
      %p46 = scmp.eq.s32.totalorder %s20, 0
      %p47 = por %p45, %p46
      %s49 = sadd.s32 %s48, 1
      %p52 = scmp.eq.s32.totalorder %s14, 1
      %p53 = scmp.ne.s32.totalorder %s48, %s50
      %p54 = scmp.eq.s32.totalorder %s14, 0
      %p55 = por %p53, %p54
      %p56 = scmp.ne.s32.totalorder %s48, %s50
      %p57 = scmp.eq.s32.totalorder %s19, 1
      %p58 = por %p56, %p57
      %p59 = scmp.ne.s32.totalorder %s50, %s51
      %p60 = scmp.eq.s32.totalorder %s19, 0
      %p61 = por %p59, %p60
      %p62 = scmp.ne.s32.totalorder %s50, %s51
      %p63 = scmp.eq.s32.totalorder %s20, 1
      %p64 = por %p62, %p63
      %p66 = scmp.ne.s32.totalorder %s51, %s65
      %p67 = scmp.eq.s32.totalorder %s20, 0
      %p68 = por %p66, %p67
      %s70 = sadd.s32 %s69, 1
      %p73 = scmp.eq.s32.totalorder %s14, 1
      %p74 = scmp.ne.s32.totalorder %s69, %s71
      %p75 = scmp.eq.s32.totalorder %s14, 0
      %p76 = por %p74, %p75
      %p77 = scmp.ne.s32.totalorder %s69, %s71
      %p78 = scmp.eq.s32.totalorder %s19, 1
      %p79 = por %p77, %p78
      %p80 = scmp.ne.s32.totalorder %s71, %s72
      %p81 = scmp.eq.s32.totalorder %s19, 0
      %p82 = por %p80, %p81
      %p83 = scmp.ne.s32.totalorder %s71, %s72
      %p84 = scmp.eq.s32.totalorder %s20, 1
      %p85 = por %p83, %p84
      %p87 = scmp.ne.s32.totalorder %s72, %s86
      %p88 = scmp.eq.s32.totalorder %s20, 0
      %p89 = por %p87, %p88
      %s91 = sadd.s32 %s90, 1
      %p94 = scmp.eq.s32.totalorder %s14, 1
      %p95 = scmp.ne.s32.totalorder %s90, %s92
      %p96 = scmp.eq.s32.totalorder %s14, 0
      %p97 = por %p95, %p96
      %p98 = scmp.ne.s32.totalorder %s90, %s92
      %p99 = scmp.eq.s32.totalorder %s19, 1
      %p100 = por %p98, %p99
      %p101 = scmp.ne.s32.totalorder %s92, %s93
      %p102 = scmp.eq.s32.totalorder %s19, 0
      %p103 = por %p101, %p102
      %p104 = scmp.ne.s32.totalorder %s92, %s93
      %p105 = scmp.eq.s32.totalorder %s20, 1
      %p106 = por %p104, %p105
      %p108 = scmp.ne.s32.totalorder %s93, %s107
      %p109 = scmp.eq.s32.totalorder %s20, 0
      %p110 = por %p108, %p109
      %s112 = sadd.s32 %s111, 1
      %p115 = scmp.eq.s32.totalorder %s14, 1
      %p116 = scmp.ne.s32.totalorder %s111, %s113
      %p117 = scmp.eq.s32.totalorder %s14, 0
      %p118 = por %p116, %p117
      %p119 = scmp.ne.s32.totalorder %s111, %s113
      %p120 = scmp.eq.s32.totalorder %s19, 1
      %p121 = por %p119, %p120
      %p122 = scmp.ne.s32.totalorder %s113, %s114
      %p123 = scmp.eq.s32.totalorder %s19, 0
      %p124 = por %p122, %p123
      %p125 = scmp.ne.s32.totalorder %s113, %s114
      %p126 = scmp.eq.s32.totalorder %s20, 1
      %p127 = por %p125, %p126
      %p129 = scmp.ne.s32.totalorder %s114, %s128
      %p130 = scmp.eq.s32.totalorder %s20, 0
      %p131 = por %p129, %p130
      %s132 = ssub.s32 %s14, %s21
      %p133 = scmp.eq.s32.totalorder %s132, 0
      %s135 = sadd.s32 %s134, 1
      %s136 = scalar_select %p133, %s134, %s135
      %p139 = pneg %p133
      %p140 = scmp.eq.s32.totalorder %s14, 1
      %p141 = por %p139, %p140
      %p142 = scmp.ne.s32.totalorder %s134, %s137
      %p143 = scmp.eq.s32.totalorder %s14, 0
      %p144 = por %p142, %p143
      %p145 = scmp.ne.s32.totalorder %s134, %s137
      %p146 = scmp.eq.s32.totalorder %s19, 1
      %p147 = por %p145, %p146
      %p148 = scmp.ne.s32.totalorder %s137, %s138
      %p149 = scmp.eq.s32.totalorder %s19, 0
      %p150 = por %p148, %p149
      %p151 = scmp.ne.s32.totalorder %s137, %s138
      %p152 = scmp.eq.s32.totalorder %s20, 1
      %p153 = por %p151, %p152
      %p155 = scmp.ne.s32.totalorder %s138, %s154
      %p156 = scmp.eq.s32.totalorder %s20, 0
      %p157 = por %p155, %p156
      %p158 = scmp.le.s32.totalorder 1, %s14
      %p159 = scmp.lt.s32.totalorder %s14, 3
      %p160 = pnand %p158, %p159
      %p161 = pneg %p160
      // Predicated region
      $region9: #{tpu_custom_call.1} parent=5 // pred_check
        _
      $region10: #{tpu_custom_call.1} parent=5 // pred_check_branch
        %163 = sbr.rel (%p160) target = $region12
      $region11: #{tpu_custom_call.1} parent=5 // pred_region
        %s164 = ssub.s32 %s14, 1
        // Predicated region
        $region13: #{tpu_custom_call.1} parent=11 // pred_check
          %p165 = pneg %p61
        $region14: #{tpu_custom_call.1} parent=11 // pred_check_branch
          %167 = sbr.rel (%p165) target = $region16
        $region15: #{tpu_custom_call.1} parent=11 // pred_region
          _
        $region16: #{tpu_custom_call.1} parent=11 // pred_fallthru
          _
        // Predicated region
        $region17: #{tpu_custom_call.1} parent=11 // pred_check
          %p168 = pneg %p82
        $region18: #{tpu_custom_call.1} parent=11 // pred_check_branch
          %170 = sbr.rel (%p168) target = $region20
        $region19: #{tpu_custom_call.1} parent=11 // pred_region
          _
        $region20: #{tpu_custom_call.1} parent=11 // pred_fallthru
          _
        // Predicated region
        $region21: #{tpu_custom_call.1} parent=11 // pred_check
          %p171 = pneg %p103
        $region22: #{tpu_custom_call.1} parent=11 // pred_check_branch
          %173 = sbr.rel (%p171) target = $region24
        $region23: #{tpu_custom_call.1} parent=11 // pred_region
          _
        $region24: #{tpu_custom_call.1} parent=11 // pred_fallthru
          _
        // Predicated region
        $region25: #{tpu_custom_call.1} parent=11 // pred_check
          %p174 = pneg %p124
        $region26: #{tpu_custom_call.1} parent=11 // pred_check_branch
          %176 = sbr.rel (%p174) target = $region28
        $region27: #{tpu_custom_call.1} parent=11 // pred_region
          _
        $region28: #{tpu_custom_call.1} parent=11 // pred_fallthru
          _
      $region12: #{tpu_custom_call.1} parent=5 // pred_fallthru
        _
      %p177 = scmp.lt.s32.totalorder %s14, 2
      // Predicated region
      $region29: #{tpu_custom_call.1} parent=5 // pred_check
        %p178 = pneg %p177
      $region30: #{tpu_custom_call.1} parent=5 // pred_check_branch
        %180 = sbr.rel (%p178) target = $region32
      $region31: #{tpu_custom_call.1} parent=5 // pred_region
        // Predicated region
        $region33: #{tpu_custom_call.1} parent=31 // pred_check
          %p181 = pneg %p34
        $region34: #{tpu_custom_call.1} parent=31 // pred_check_branch
          %183 = sbr.rel (%p181) target = $region36
        $region35: #{tpu_custom_call.1} parent=31 // pred_region
          %s184 = smul.u32 2, %s14
          %p185 = scmp.lt.s32.totalorder %s184, 3
          %s186 = scalar_select %p185, %s184, 3
          %s187 = smul.addr %s186, 4
          %s188 = scalar_lea.vmem %s0, %s187
          %s189 = smul.u32 2, %s14
        $region36: #{tpu_custom_call.1} parent=31 // pred_fallthru
          _
      $region32: #{tpu_custom_call.1} parent=5 // pred_fallthru
        _
      %p190 = scmp.le.s32.totalorder 1, %s14
      %p191 = scmp.lt.s32.totalorder %s14, 3
      %p192 = pnand %p190, %p191
      %p193 = pneg %p192
      // Predicated region
      $region37: #{tpu_custom_call.1} parent=5 // pred_check
        _
      $region38: #{tpu_custom_call.1} parent=5 // pred_check_branch
        %195 = sbr.rel (%p192) target = $region40
      $region39: #{tpu_custom_call.1} parent=5 // pred_region
        %s196 = ssub.s32 %s14, 1
        %s197 = smul.u32 2, %s19
        %p198 = scmp.lt.s32.totalorder %s197, 3
        %s199 = scalar_select %p198, %s197, 3
        %s200 = smul.addr %s199, 4
        %s201 = scalar_lea.vmem %s0, %s200
        %p202 = pneg %p40
        %p203 = pneg %p37
        %p204 = pneg %p61
        %p205 = pneg %p58
        %p206 = pneg %p82
        %p207 = pneg %p79
        %p208 = pneg %p103
        %p209 = pneg %p100
        %p210 = pneg %p124
        %p211 = pneg %p121
        %p212 = pneg %p150
        %p213 = pneg %p147
        %s214 = sand.u32 %s137, 1
        %s215 = scalar_lea.sflag [#allocation3], %s214
        %s216 = sand.u32 %s137, 1
        %s217 = smul.addr %s216, 8
        %s218 = scalar_lea.vmem [#allocation2], %s217
        %s219 = smul.u32 2, %s19
        %p220 = scmp.lt.s32.totalorder %s219, 3
        %s221 = scalar_select %p220, %s219, 3
        %s222 = smul.addr %s221, 4
        %s223 = scalar_lea.vmem %s0, %s222
        %s224 = smul.u32 2, %s19
        %s225 = smul.u32 2, %s19
        %v226 = vld [vmem:[%s1] sm:$0xff]
        %v227 = vld [vmem:[%s1 + $0x8] sm:$0x3]
        %v228 = vld [vmem:[%s223] sm:$0xff]
        %v229 = vld [vmem:[%s2] sm:$0xff]
        %v230 = vld [vmem:[%s2 + $0x8] sm:$0x3]
        %232 = vset.pattern.permute.xlu0 0
        %233 = vperm.xlu0 %232, %v229
        %v234 = vpop.permute.xlu0 %233
        %237 = vset.pattern.permute.xlu0 0
        %238 = vperm.xlu0 %237, %v230
        %v239 = vpop.permute.xlu0 %238
        %v242 = vcombine.high %v228, %v228
        %vm243 = vcmask 31744
        %v245 = vsel %vm243, %v226, 0
        %v248 = vsel %vm243, %v227, 0
        %vm250 = vcmask 1043456
        %v251 = vsel %vm250, %v228, 0
        %v253 = vsel %vm250, %v242, 0
        %255 = vmatprep.subr.mxu0 0.0
        %256 = vmatpush1.msra.mxu0 0.0
        %257 = vmatprep.subr.mxu0 0.0
        %258 = vmatpush1.msra.mxu0 0.0
        %259 = vmatprep.subr.mxu0 0.0
        %260 = vmatpush1.msra.mxu0 0.0
        %261 = vmatprep.subr.mxu0 0.0
        %262 = vmatpush1.msra.mxu0 0.0
        %263 = vmatprep.subr.mxu0 0.0
        %264 = vmatpush1.msra.mxu0 0.0
        %265 = vmatprep.subr.mxu0 0.0
        %266 = vmatpush1.msra.mxu0 0.0
        %267 = vmatprep.subr.mxu0 0.0
        %268 = vmatpush1.msra.mxu0 0.0
        %269 = vmatprep.subr.mxu0 0.0
        %270 = vmatpush1.msra.mxu0 0.0
        %271 = vmatprep.subr.mxu0 0.0
        %272 = vmatpush1.msra.mxu0 0.0
        %273 = vmatprep.subr.mxu0 0.0
        %274 = vmatpush1.msra.mxu0 0.0
        %275 = vmatprep.subr.mxu0 0.0
        %276 = vmatpush1.msra.mxu0 0.0
        %277 = vmatprep.subr.mxu0 0.0
        %278 = vmatpush1.msra.mxu0 0.0
        %279 = vmatprep.subr.mxu0 0.0
        %280 = vmatpush1.msra.mxu0 0.0
        %281 = vmatprep.subr.mxu0 0.0
        %282 = vmatpush1.msra.mxu0 0.0
        %283 = vmatprep.subr.mxu0 0.0
        %284 = vmatpush1.msra.mxu0 0.0
        %285 = vmatprep.subr.mxu0 %v253
        %286 = vmatpush1.msra.mxu0 %v251
        %287 = vmatprep.subr.mxu0 0.0
        %288 = vmatpush2.msra.mxu0 0.0
        %289 = vmatprep.subr.mxu0 0.0
        %290 = vmatpush2.msra.mxu0 0.0
        %291 = vmatprep.subr.mxu0 0.0
        %292 = vmatpush2.msra.mxu0 0.0
        %293 = vmatprep.subr.mxu0 0.0
        %294 = vmatpush2.msra.mxu0 0.0
        %295 = vmatprep.subr.mxu0 0.0
        %296 = vmatpush2.msra.mxu0 0.0
        %297 = vmatprep.subr.mxu0 0.0
        %298 = vmatpush2.msra.mxu0 0.0
        %299 = vmatprep.subr.mxu0 0.0
        %300 = vmatpush2.msra.mxu0 0.0
        %301 = vmatprep.subr.mxu0 0.0
        %302 = vmatpush2.msra.mxu0 0.0
        %303 = vmatprep.subr.mxu0 0.0
        %304 = vmatpush2.msra.mxu0 0.0
        %305 = vmatprep.subr.mxu0 0.0
        %306 = vmatpush2.msra.mxu0 0.0
        %307 = vmatprep.subr.mxu0 0.0
        %308 = vmatpush2.msra.mxu0 0.0
        %309 = vmatprep.subr.mxu0 0.0
        %310 = vmatpush2.msra.mxu0 0.0
        %311 = vmatprep.subr.mxu0 0.0
        %312 = vmatpush2.msra.mxu0 0.0
        %313 = vmatprep.subr.mxu0 0.0
        %314 = vmatpush2.msra.mxu0 0.0
        %315 = vmatprep.subr.mxu0 0.0
        %316 = vmatpush2.msra.mxu0 0.0
        %317 = vmatprep.subr.mxu0 0.0
        %318 = vmatpush2.msra.mxu0 0.0
        %319 = vmatprep.mubr.f32.mxu0 0.0
        %320 = vmatmul.mubr.f32.gmra.mxu0 %v245
        %v321 = vpop.f32.mrf.mxu0
        %v322 = vadd.f32 %v234, %v321
        %v323 = vpop.f32.mrf.mxu0
        %v324 = vadd.f32 %v234, %v323
        %325 = vmatprep.mubr.f32.mxu0 0.0
        %326 = vmatmul.mubr.f32.gmra.mxu0 %v248
        %v327 = vpop.f32.mrf.mxu0
        %v328 = vadd.f32 %v239, %v327
        %v329 = vpop.f32.mrf.mxu0
        %v330 = vadd.f32 %v239, %v329
        %331 = vdwg.mxu0
        %v332 = vmax.f32 %v322, 0.0
        %v333 = vmax.f32 %v324, 0.0
        %v334 = vmax.f32 %v328, 0.0
        %v335 = vmax.f32 %v330, 0.0
        %v336 = vld [vmem:[%s3] sm:$0x7]
        %v337 = vld [vmem:[%s4] sm:$0x7]
        %339 = vset.pattern.permute.xlu0 0
        %340 = vperm.xlu0 %339, %v337
        %v341 = vpop.permute.xlu0 %340
        %vm343 = vcmask 80896
        %v345 = vsel %vm343, %v336, 0
        %vm347 = vcmask 1041408
        %v349 = vsel %vm347, %v334, 0
        %v352 = vsel %vm347, %v335, 0
        %354 = vmatprep.subr.mxu0 0.0
        %355 = vmatpush1.msra.mxu0 0.0
        %356 = vmatprep.subr.mxu0 0.0
        %357 = vmatpush1.msra.mxu0 0.0
        %358 = vmatprep.subr.mxu0 0.0
        %359 = vmatpush1.msra.mxu0 0.0
        %360 = vmatprep.subr.mxu0 0.0
        %361 = vmatpush1.msra.mxu0 0.0
        %362 = vmatprep.subr.mxu0 0.0
        %363 = vmatpush1.msra.mxu0 0.0
        %364 = vmatprep.subr.mxu0 0.0
        %365 = vmatpush1.msra.mxu0 0.0
        %366 = vmatprep.subr.mxu0 0.0
        %367 = vmatpush1.msra.mxu0 0.0
        %368 = vmatprep.subr.mxu0 0.0
        %369 = vmatpush1.msra.mxu0 0.0
        %370 = vmatprep.subr.mxu0 0.0
        %371 = vmatpush1.msra.mxu0 0.0
        %372 = vmatprep.subr.mxu0 0.0
        %373 = vmatpush1.msra.mxu0 0.0
        %374 = vmatprep.subr.mxu0 0.0
        %375 = vmatpush1.msra.mxu0 0.0
        %376 = vmatprep.subr.mxu0 0.0
        %377 = vmatpush1.msra.mxu0 0.0
        %378 = vmatprep.subr.mxu0 0.0
        %379 = vmatpush1.msra.mxu0 0.0
        %380 = vmatprep.subr.mxu0 0.0
        %381 = vmatpush1.msra.mxu0 0.0
        %382 = vmatprep.subr.mxu0 %v352
        %383 = vmatpush1.msra.mxu0 %v349
        %384 = vmatprep.subr.mxu0 %v333
        %385 = vmatpush1.msra.mxu0 %v332
        %386 = vmatprep.subr.mxu0 0.0
        %387 = vmatpush2.msra.mxu0 0.0
        %388 = vmatprep.subr.mxu0 0.0
        %389 = vmatpush2.msra.mxu0 0.0
        %390 = vmatprep.subr.mxu0 0.0
        %391 = vmatpush2.msra.mxu0 0.0
        %392 = vmatprep.subr.mxu0 0.0
        %393 = vmatpush2.msra.mxu0 0.0
        %394 = vmatprep.subr.mxu0 0.0
        %395 = vmatpush2.msra.mxu0 0.0
        %396 = vmatprep.subr.mxu0 0.0
        %397 = vmatpush2.msra.mxu0 0.0
        %398 = vmatprep.subr.mxu0 0.0
        %399 = vmatpush2.msra.mxu0 0.0
        %400 = vmatprep.subr.mxu0 0.0
        %401 = vmatpush2.msra.mxu0 0.0
        %402 = vmatprep.subr.mxu0 0.0
        %403 = vmatpush2.msra.mxu0 0.0
        %404 = vmatprep.subr.mxu0 0.0
        %405 = vmatpush2.msra.mxu0 0.0
        %406 = vmatprep.subr.mxu0 0.0
        %407 = vmatpush2.msra.mxu0 0.0
        %408 = vmatprep.subr.mxu0 0.0
        %409 = vmatpush2.msra.mxu0 0.0
        %410 = vmatprep.subr.mxu0 0.0
        %411 = vmatpush2.msra.mxu0 0.0
        %412 = vmatprep.subr.mxu0 0.0
        %413 = vmatpush2.msra.mxu0 0.0
        %414 = vmatprep.subr.mxu0 0.0
        %415 = vmatpush2.msra.mxu0 0.0
        %416 = vmatprep.subr.mxu0 0.0
        %417 = vmatpush2.msra.mxu0 0.0
        %418 = vmatprep.mubr.f32.mxu0 0.0
        %419 = vmatmul.mubr.f32.gmra.mxu0 %v345
        %v420 = vpop.f32.mrf.mxu0
        %v421 = vadd.f32 %v341, %v420
        %v422 = vpop.f32.mrf.mxu0
        %v423 = vadd.f32 %v341, %v422
        %424 = vdwg.mxu0
        %v427 = vcombine.low %v421, %v423
        %429 = vst [vmem:[%s218] sm:$0x77] %v427
        %s430 = sand.u32 %s137, 1
        %s431 = scalar_lea.sflag [#allocation3], %s430
        %s432 = sand.u32 %s137, 1
        %s433 = smul.addr %s432, 8
        %s434 = scalar_lea.vmem [#allocation2], %s433
        // Predicated region
        $region41: #{tpu_custom_call.1} parent=39 // pred_check
          %p435 = pneg %p147
        $region42: #{tpu_custom_call.1} parent=39 // pred_check_branch
          %437 = sbr.rel (%p435) target = $region44
        $region43: #{tpu_custom_call.1} parent=39 // pred_region
          %s438 = smul.u32 2, %s19
          %s440 = ssub.s32 128, 128
          %441 = vsyncadd %s431, %s440
          %s442 = smul.addr %s438, 64
          %s443 = scalar_lea.hbm %s5, %s442
          %s445 = sshll.u32 %s434, 4
          %s446 = int_to_ptr.vmem [resolvable:$true] %s445
          %448 = dma.vmem_to_hbm [thread:$0]  %s446, 128, %s443, %s431
        $region44: #{tpu_custom_call.1} parent=39 // pred_fallthru
          _
      $region40: #{tpu_custom_call.1} parent=5 // pred_fallthru
        _
      %p449 = scmp.le.s32.totalorder 2, %s14
      // Predicated region
      $region45: #{tpu_custom_call.1} parent=5 // pred_check
        %p450 = pneg %p449
      $region46: #{tpu_custom_call.1} parent=5 // pred_check_branch
        %452 = sbr.rel (%p450) target = $region48
      $region47: #{tpu_custom_call.1} parent=5 // pred_region
        %s453 = ssub.s32 %s14, 2
        // Predicated region
        $region49: #{tpu_custom_call.1} parent=47 // pred_check
          %p454 = pneg %p153
        $region50: #{tpu_custom_call.1} parent=47 // pred_check_branch
          %456 = sbr.rel (%p454) target = $region52
        $region51: #{tpu_custom_call.1} parent=47 // pred_region
          %s457 = sand.u32 %s138, 1
          %s458 = scalar_lea.sflag [#allocation3], %s457
          %s459 = sand.u32 %s138, 1
          %s460 = smul.addr %s459, 8
          %s461 = scalar_lea.vmem [#allocation2], %s460
          %462 = dma.done %s458, 128
        $region52: #{tpu_custom_call.1} parent=47 // pred_fallthru
          _
      $region48: #{tpu_custom_call.1} parent=5 // pred_fallthru
        _
    $region6: #{tpu_custom_call.1} parent=1 // loop_footer
      %s18 = sadd.s32 1, %s14
    $region7: #{tpu_custom_call.1} parent=1 // loop_footer_branch
      %13 = sbr.rel target = $region3
    $region8: #{tpu_custom_call.1} parent=1 // loop_exit
      _
    %463 = vsyncpa [#allocation3], 1
    %s464 = scalar_lea.sflag [#allocation3], 1
    %465 = vsyncpa %s464, 1

</llo_original>
